<compile_context>
chip_gen: v7x
topology: tpu7x:2x2x1
jax: 0.10.0
libtpu: 0.0.40
codegen_flags: <defaults>
</compile_context>

<pallas_src>
import jax
import jax.numpy as jnp
from jax.experimental import pallas as pl
from jax.experimental.pallas import tpu as pltpu

BETA = 0.3
LANE = 128

# ~4 MiB blocks: with in + out double buffering that is ~16 MiB of live VMEM —
# inside every generation's budget once vmem_limit_bytes is raised — and in the
# tile-size class measured at ~86% of the HBM roofline.
_TARGET_BLOCK_BYTES = 4 * 1024 * 1024
# Never shrink blocks below ~1 MiB when splitting for grid-step count (the
# 1 MiB class still sits at ~85% of roofline; smaller tiles fall off a cliff).
_MIN_BLOCK_BYTES = 1 * 1024 * 1024
# Aim for >= 8 grid steps on large arrays so (a) v7x's two TensorCores each get
# >= 4 blocks of the "parallel" axis (prefetch overlap stays alive per core),
# and (b) single-TC v5e/v6e overlap in-DMA / compute / out-DMA across steps.
_MIN_GRID_STEPS = 8


def _round_up(v, m):
    return (v + m - 1) // m * m


def _vmem_limit_bytes():
    """Generation-aware scoped-VMEM budget for the pallas_call."""
    limit = 48 * 1024 * 1024  # ample for 4 MiB blocks, double buffered in+out
    try:  # cap at 3/4 of physical VMEM (v7x has only 64 MiB per TensorCore)
        cap = int(getattr(pltpu.get_tpu_info(), "vmem_capacity_bytes", 0))
        if cap > 0:
            limit = min(limit, max(cap * 3 // 4, 8 * 1024 * 1024))
    except Exception:
        pass
    return limit


def _swish_kernel(x_ref, o_ref):
    x = x_ref[...]
    # f32/bf16 compute natively (v6e/v7x VPU + EUP have bf16 paths); upcast
    # only other narrow float dtypes to f32.
    if jnp.dtype(x.dtype).name not in ("float32", "bfloat16"):
        x = x.astype(jnp.float32)
    # sigmoid(z) == 0.5 * tanh(z / 2) + 0.5  -> a single EUP transcendental per
    # element (instead of exp + divide), keeping the kernel firmly HBM-bound.
    y = x * (jnp.tanh(x * (0.5 * BETA)) * 0.5 + 0.5)
    o_ref[...] = y.astype(o_ref.dtype)


def _swish_jnp(x):
    """Plain-JAX Swish for tiny ragged tails (same formulation as the kernel)."""
    xf = x
    if jnp.dtype(x.dtype).name not in ("float32", "bfloat16"):
        xf = x.astype(jnp.float32)
    return (xf * (jnp.tanh(xf * (0.5 * BETA)) * 0.5 + 0.5)).astype(x.dtype)


def _pick_width(n):
    """Widest lane-dense slab width dividing n (prefers >= 8 full sublane rows)."""
    candidates = (32 * LANE, 16 * LANE, 8 * LANE, 4 * LANE, 2 * LANE, LANE)
    for cand in candidates:
        if n % cand == 0 and n // cand >= 8:
            return cand
    for cand in candidates:
        if n % cand == 0:
            return cand
    return None


def _swish_2d(flat, width):
    """Run the kernel on a 128-aligned flat array viewed as (rows, width)."""
    n = flat.shape[0]
    dtype = flat.dtype
    itemsize = jnp.dtype(dtype).itemsize
    rows = n // width

    # Dtype-aware sublane granule: 8 rows for f32, 16 for bf16/f16, 32 for
    # int8/fp8 (packed dtypes fill 16/32 sublanes per vreg).
    granule = max(8, 32 // itemsize)
    bytes_per_row = width * itemsize

    target_rows = max(granule,
                      (_TARGET_BLOCK_BYTES // bytes_per_row) // granule * granule)
    min_rows = max(granule,
                   (_MIN_BLOCK_BYTES // bytes_per_row) // granule * granule)
    steps_rows = _round_up(pl.cdiv(rows, _MIN_GRID_STEPS), granule)
    tile_rows = min(target_rows, max(min_rows, steps_rows))
    tile_rows = min(tile_rows, _round_up(rows, granule))

    grid = (pl.cdiv(rows, tile_rows),)
    x2d = flat.reshape(rows, width)  # contiguous reshape: no copy

    out2d = pl.pallas_call(
        _swish_kernel,
        out_shape=jax.ShapeDtypeStruct((rows, width), dtype),
        grid_spec=pltpu.PrefetchScalarGridSpec(
            num_scalar_prefetch=0,
            grid=grid,
            in_specs=[pl.BlockSpec((tile_rows, width), lambda i: (i, 0))],
            out_specs=pl.BlockSpec((tile_rows, width), lambda i: (i, 0)),
        ),
        compiler_params=pltpu.CompilerParams(
            dimension_semantics=("parallel",),
            vmem_limit_bytes=_vmem_limit_bytes(),
        ),
        cost_estimate=pl.CostEstimate(
            flops=4 * n, transcendentals=n, bytes_accessed=2 * n * itemsize),
    )(x2d)
    return out2d.reshape(-1)


def swish(x: jax.Array) -> jax.Array:
    """Elementwise Swish: x * sigmoid(0.3 * x); any shape, float dtypes."""
    orig_shape = x.shape
    n = x.size
    if n == 0:
        return x

    flat = x.reshape(-1)
    width = _pick_width(n)
    if width is not None:
        # Aligned case (size % 128 == 0): fully zero-copy around the kernel.
        return _swish_2d(flat, width).reshape(orig_shape)

    # Ragged case: no full-array pad/slice copies — kernel on the 128-aligned
    # prefix, tiny (< 128-element) jnp tail, one concat to stitch.
    main_n = n - (n % LANE)
    if main_n == 0:
        return _swish_jnp(x)  # fewer than 128 elements total; kernel pointless
    main_out = _swish_2d(flat[:main_n], _pick_width(main_n))
    tail_out = _swish_jnp(flat[main_n:])
    return jnp.concatenate([main_out, tail_out]).reshape(orig_shape)


if __name__ == "__main__":
    key = jax.random.PRNGKey(0)
    k0, k1 = jax.random.split(key)

    # NCHW activation, aligned path (2*4*16*16 = 2048 elements).
    x = jax.random.normal(k0, (2, 4, 16, 16), dtype=jnp.float32)
    y = jax.block_until_ready(swish(x))
    y_ref = x * jax.nn.sigmoid(x * BETA)
    assert y.shape == x.shape and y.dtype == x.dtype
    assert jnp.allclose(y, y_ref, atol=1e-5, rtol=1e-5)

    # Ragged path (903 elements, not a multiple of 128): kernel prefix + tail.
    x2 = jax.random.normal(k1, (3, 7, 43), dtype=jnp.float32)
    y2 = jax.block_until_ready(swish(x2))
    y2_ref = x2 * jax.nn.sigmoid(x2 * BETA)
    assert y2.shape == x2.shape and y2.dtype == x2.dtype
    assert jnp.allclose(y2, y2_ref, atol=1e-5, rtol=1e-5)

    print("KERNEL_OK")
</pallas_src>

<mosaic_0001>
module attributes {stable_mosaic.version = 11 : i64} {
  func.func @_swish_kernel(%arg0: i32, %arg1: memref<8x256xf32, #tpu.memory_space<vmem>>, %arg2: memref<8x256xf32, #tpu.memory_space<vmem>>) attributes {dimension_semantics = [#tpu.dimension_semantics<parallel>], iteration_bounds = array<i64: 1>, scalar_prefetch = 0 : i64, scratch_operands = 0 : i64, tpu.core_type = #tpu.core_type<tc>, window_params = [{transform_indices = @transform_0, window_bounds = array<i64: 8, 256>}, {transform_indices = @transform_1, window_bounds = array<i64: 8, 256>}]} {
    %c0 = arith.constant 0 : index
    %c0_0 = arith.constant 0 : index
    %0 = vector.load %arg1[%c0, %c0_0] : memref<8x256xf32, #tpu.memory_space<vmem>>, vector<8x256xf32>
    %cst = arith.constant 1.500000e-01 : f32
    %1 = vector.broadcast %cst : f32 to vector<8x256xf32>
    %2 = arith.mulf %0, %1 : vector<8x256xf32>
    %3 = math.tanh %2 : vector<8x256xf32>
    %cst_1 = arith.constant 5.000000e-01 : f32
    %4 = vector.broadcast %cst_1 : f32 to vector<8x256xf32>
    %5 = arith.mulf %3, %4 : vector<8x256xf32>
    %cst_2 = arith.constant 5.000000e-01 : f32
    %6 = vector.broadcast %cst_2 : f32 to vector<8x256xf32>
    %7 = arith.addf %5, %6 : vector<8x256xf32>
    %8 = arith.mulf %0, %7 : vector<8x256xf32>
    %c0_3 = arith.constant 0 : index
    %c0_4 = arith.constant 0 : index
    %9 = vector.load %arg2[%c0_3, %c0_4] : memref<8x256xf32, #tpu.memory_space<vmem>>, vector<8x256xf32>
    tpu.vector_store %arg2[%c0_3, %c0_4], %8 {strides = array<i32>} : memref<8x256xf32, #tpu.memory_space<vmem>>, vector<8x256xf32>,
    return
  }
  func.func @transform_0(%arg0: i32) -> (i32, i32) {
    %c0_i32 = arith.constant 0 : i32
    %c0_i32_0 = arith.constant 0 : i32
    return %arg0, %c0_i32 : i32, i32
  }
  func.func @transform_1(%arg0: i32) -> (i32, i32) {
    %c0_i32 = arith.constant 0 : i32
    %c0_i32_0 = arith.constant 0 : i32
    return %arg0, %c0_i32 : i32, i32
  }
}

</mosaic_0001>

<llo_original>
// kernel: tpu_custom_call.1
$region0: #{tpu_custom_call.1}
  #allocation0 [shape = 'u32[]', space=smem, size = 0x4, offset = 0x4, fixed_abs, tag = 'smem constant byte address 0x4 - core index']
  #allocation1 [shape = 'u32[144,128]{1,0:T(1,128)}', space=vmem, size = 0x12000, scoped, tag = 'internal scratch']
  %s0 = inlined_call_operand.hbm [shape: f32[8,256], index: 0, kind: input, shape index: {}]
  %s1 = inlined_call_operand.hbm [shape: f32[8,256], index: 1, kind: output, shape index: {}]
  %s2 = sld [smem:[#allocation0]]
  $region18: #{tpu_custom_call.1} parent=0
    _
  %s4 = ssub.s32 1, %s2
  %s5 = scalar_select 0, %s4, %s2
  $region1: #{tpu_custom_call.1} parent=0
    #allocation2 [shape = 'u8[8192]{0}', space=vmem, size = 0x2000, scoped, tag = 'input window, operand 0, single buffered']
    #allocation3 [shape = 's32[1]{0}', space=sflag, size = 0x4, scoped, tag = 'scoped memory for tpu_custom_call.1']
    #allocation4 [shape = 's32[1]{0}', space=sflag, size = 0x4, scoped, tag = 'scoped memory for tpu_custom_call.1']
    #allocation5 [shape = 'u8[8192]{0}', space=vmem, size = 0x2000, scoped, tag = 'output window, operand 0, single buffered']
    %6 = vsyncpa [#allocation3], 0
    %7 = vsyncpa [#allocation4], 0
    // Predicated region
    $region2: #{tpu_custom_call.1} parent=1 // pred_check
      _
    $region3: #{tpu_custom_call.1} parent=1 // pred_check_branch
      %9 = sbr.rel (0) target = $region5
    $region4: #{tpu_custom_call.1} parent=1 // pred_region
      %s11 = ssub.s32 256, 256
      %12 = vsyncadd [#allocation3], %s11
      %s14 = sshll.u32 [#allocation2], 4
      %s15 = int_to_ptr.vmem [resolvable:$true] %s14
      %17 = dma.hbm_to_vmem [thread:$0]  %s0, 256, %s15, [#allocation3]
    $region5: #{tpu_custom_call.1} parent=1 // pred_fallthru
      _
    // Predicated region
    $region6: #{tpu_custom_call.1} parent=1 // pred_check
      _
    $region7: #{tpu_custom_call.1} parent=1 // pred_check_branch
      %19 = sbr.rel (0) target = $region9
    $region8: #{tpu_custom_call.1} parent=1 // pred_region
      %20 = dma.done [#allocation3], 256
    $region9: #{tpu_custom_call.1} parent=1 // pred_fallthru
      _
    %v21 = vld [vmem:[#allocation2] sm:$0xff]
    %v22 = vld [vmem:[#allocation2 + $0x8] sm:$0xff]
    %v23 = vmul.f32 %v21, 0.15
    %v24 = vmul.f32 %v22, 0.15
    %v25 = vtanh.pop %v23
    %v26 = vtanh.pop %v24
    %v27 = vmul.f32 %v25, 0.5
    %v28 = vmul.f32 %v26, 0.5
    %v29 = vadd.f32 %v27, 0.5
    %v30 = vadd.f32 %v28, 0.5
    %v31 = vmul.f32 %v21, %v29
    %v32 = vmul.f32 %v22, %v30
    %33 = vst [vmem:[#allocation5] sm:$0xff] %v31
    %34 = vst [vmem:[#allocation5 + $0x8] sm:$0xff] %v32
    // Predicated region
    $region10: #{tpu_custom_call.1} parent=1 // pred_check
      _
    $region11: #{tpu_custom_call.1} parent=1 // pred_check_branch
      %36 = sbr.rel (0) target = $region13
    $region12: #{tpu_custom_call.1} parent=1 // pred_region
      %s38 = ssub.s32 256, 256
      %39 = vsyncadd [#allocation4], %s38
      %s41 = sshll.u32 [#allocation5], 4
      %s42 = int_to_ptr.vmem [resolvable:$true] %s41
      %44 = dma.vmem_to_hbm [thread:$0]  %s42, 256, %s1, [#allocation4]
    $region13: #{tpu_custom_call.1} parent=1 // pred_fallthru
      _
    // Predicated region
    $region14: #{tpu_custom_call.1} parent=1 // pred_check
      _
    $region15: #{tpu_custom_call.1} parent=1 // pred_check_branch
      %46 = sbr.rel (0) target = $region17
    $region16: #{tpu_custom_call.1} parent=1 // pred_region
      %47 = dma.done [#allocation4], 256
    $region17: #{tpu_custom_call.1} parent=1 // pred_fallthru
      _
    %48 = vsyncpa [#allocation3], 1
    %49 = vsyncpa [#allocation4], 1

</llo_original>
